<compile_context>
chip_gen: v6e
topology: v6e:2x2x1
jax: 0.10.0
libtpu: 0.0.40
codegen_flags: <defaults>
</compile_context>

<pallas_src>
import jax
import jax.numpy as jnp
from jax import lax
from jax.experimental import pallas as pl
from jax.experimental.pallas import tpu as pltpu


_UNROLL_MAX = 32                        # static-unroll threshold for row reversal
_TARGET_BLOCK_BYTES = 2 * 1024 * 1024   # ~2 MiB/block; x4 (in+out, double-buffered)
                                        # stays under the 16 MiB v5e scoped default


def _vflip_kernel(flip_ref, x_ref, o_ref):
    """Conditionally reverse the row (sublane) axis of one (BP, TH, W) block."""
    th = x_ref.shape[1]
    do_flip = flip_ref[0] != 0

    @pl.when(do_flip)
    def _flip():
        if th <= _UNROLL_MAX:
            # Normal path: TH == 8 (one sublane granule) -> 8 static row copies.
            for j in range(th):
                o_ref[:, pl.ds(j, 1), :] = x_ref[:, pl.ds(th - 1 - j, 1), :]
        else:
            # Fallback path (H not a multiple of 8 and large): dynamic row loop.
            def body(j, carry):
                o_ref[:, pl.ds(th - 1 - j, 1), :] = x_ref[:, pl.ds(j, 1), :]
                return carry
            lax.fori_loop(0, th, body, 0)

    @pl.when(jnp.logical_not(do_flip))
    def _copy():
        o_ref[...] = x_ref[...]


def vflip_pallas(img, flip_flag):
    """Flip `img` along dim -2 iff flip_flag != 0.  img: (..., H, W)."""
    orig_shape = img.shape
    H, W = orig_shape[-2], orig_shape[-1]
    P = 1
    for d in orig_shape[:-2]:
        P *= d
    x = img.reshape(P, H, W)

    # Row tile: 8-row sublane granule when H allows it, otherwise the full column
    # (full-extent second-to-last dim always satisfies the (8,128) block rule).
    TH = 8 if H % 8 == 0 else H
    nH = H // TH

    # Plane-block: largest divisor of P whose block stays near the VMEM budget.
    slab_bytes = TH * W * x.dtype.itemsize
    max_bp = int(max(1, min(P, _TARGET_BLOCK_BYTES // max(1, slab_bytes))))
    BP = 1
    for cand in range(max_bp, 0, -1):
        if P % cand == 0:
            BP = cand
            break

    flag = jnp.asarray(flip_flag, dtype=jnp.int32).reshape((1,))

    def in_map(p, h, flip_ref):
        # Mirror the H-tile order only when flipping.
        hh = jnp.where(flip_ref[0] != 0, nH - 1 - h, h)
        return (p, hh, 0)

    def out_map(p, h, flip_ref):
        return (p, h, 0)

    out = pl.pallas_call(
        _vflip_kernel,
        out_shape=jax.ShapeDtypeStruct((P, H, W), x.dtype),
        grid_spec=pltpu.PrefetchScalarGridSpec(
            num_scalar_prefetch=1,
            grid=(P // BP, nH),
            in_specs=[pl.BlockSpec((BP, TH, W), in_map)],
            out_specs=pl.BlockSpec((BP, TH, W), out_map),
        ),
        compiler_params=pltpu.CompilerParams(
            dimension_semantics=("parallel", "parallel")),
    )(flag, x)
    return out.reshape(orig_shape)


def sync_random_vertical_flip(imgs, key, p=0.5):
    """Pallas equivalent of SyncRandomVerticalFlip.forward.

    imgs: a single array or a list/tuple of arrays shaped (..., H, W).
    key:  jax PRNG key used for the single shared coin (replaces torch.rand).
    """
    single = not isinstance(imgs, (list, tuple))
    img_list = [imgs] if single else list(imgs)

    u = jax.random.uniform(key, ())
    flip_flag = (u < p).astype(jnp.int32)   # one shared decision for all images

    out = [vflip_pallas(img, flip_flag) for img in img_list]
    return out[0] if single else out


if __name__ == "__main__":
    key = jax.random.PRNGKey(0)
    k_data, k_coin = jax.random.split(key)

    x = jax.random.normal(k_data, (2, 4, 16, 16), dtype=jnp.float32)
    imgs = [x[0], x[1]]          # the module operates on a list of images (C, H, W)

    # Deterministically exercise both branches of the coin.
    flipped = sync_random_vertical_flip(imgs, k_coin, p=1.0)   # always flips
    same = sync_random_vertical_flip(imgs, k_coin, p=0.0)      # never flips
    flipped = jax.block_until_ready(flipped)
    same = jax.block_until_ready(same)

    for a, f, s in zip(imgs, flipped, same):
        ref = jnp.flip(a, axis=-2)
        assert f.shape == ref.shape and f.dtype == ref.dtype
        assert jnp.array_equal(f, ref), "flip branch mismatch"
        assert jnp.array_equal(s, a), "no-flip branch mismatch"

    # Random behaviour at p=0.5 must match whichever branch the shared coin picked.
    out = sync_random_vertical_flip(imgs, k_coin, p=0.5)
    out = jax.block_until_ready(out)
    did_flip = bool(jax.random.uniform(k_coin, ()) < 0.5)
    for a, o in zip(imgs, out):
        expect = jnp.flip(a, axis=-2) if did_flip else a
        assert jnp.array_equal(o, expect), "p=0.5 branch mismatch"

    print("KERNEL_OK")
</pallas_src>

<mosaic_0001>
module attributes {stable_mosaic.version = 11 : i64} {
  func.func @_vflip_kernel(%arg0: i32, %arg1: i32, %arg2: memref<1xi32, #tpu.memory_space<smem>>, %arg3: memref<4x8x16xf32, #tpu.memory_space<vmem>>, %arg4: memref<4x8x16xf32, #tpu.memory_space<vmem>>) attributes {dimension_semantics = [#tpu.dimension_semantics<parallel>, #tpu.dimension_semantics<parallel>], iteration_bounds = array<i64: 1, 2>, scalar_prefetch = 1 : i64, scratch_operands = 0 : i64, tpu.core_type = #tpu.core_type<tc>, window_params = [{transform_indices = @transform_0, window_bounds = array<i64: 4, 8, 16>}, {transform_indices = @transform_1, window_bounds = array<i64: 4, 8, 16>}]} {
    %c0 = arith.constant 0 : index
    %0 = memref.load %arg2[%c0] : memref<1xi32, #tpu.memory_space<smem>>
    %c0_i32 = arith.constant 0 : i32
    %1 = arith.cmpi ne, %0, %c0_i32 : i32
    %2 = arith.extui %1 : i1 to i32
    %c0_i32_0 = arith.constant 0 : i32
    %3 = arith.cmpi ne, %2, %c0_i32_0 : i32
    scf.if %3 {
      %c0_2 = arith.constant 0 : index
      %c7 = arith.constant 7 : index
      %c0_3 = arith.constant 0 : index
      %7 = vector.load %arg3[%c0_2, %c7, %c0_3] : memref<4x8x16xf32, #tpu.memory_space<vmem>>, vector<4x1x16xf32>
      %c0_4 = arith.constant 0 : index
      %c0_5 = arith.constant 0 : index
      %c0_6 = arith.constant 0 : index
      %8 = vector.load %arg4[%c0_4, %c0_5, %c0_6] : memref<4x8x16xf32, #tpu.memory_space<vmem>>, vector<4x1x16xf32>
      tpu.vector_store %arg4[%c0_4, %c0_5, %c0_6], %7 {strides = array<i32>} : memref<4x8x16xf32, #tpu.memory_space<vmem>>, vector<4x1x16xf32>,
      %c0_7 = arith.constant 0 : index
      %c6 = arith.constant 6 : index
      %c0_8 = arith.constant 0 : index
      %9 = vector.load %arg3[%c0_7, %c6, %c0_8] : memref<4x8x16xf32, #tpu.memory_space<vmem>>, vector<4x1x16xf32>
      %c0_9 = arith.constant 0 : index
      %c1 = arith.constant 1 : index
      %c0_10 = arith.constant 0 : index
      %10 = vector.load %arg4[%c0_9, %c1, %c0_10] : memref<4x8x16xf32, #tpu.memory_space<vmem>>, vector<4x1x16xf32>
      tpu.vector_store %arg4[%c0_9, %c1, %c0_10], %9 {strides = array<i32>} : memref<4x8x16xf32, #tpu.memory_space<vmem>>, vector<4x1x16xf32>,
      %c0_11 = arith.constant 0 : index
      %c5 = arith.constant 5 : index
      %c0_12 = arith.constant 0 : index
      %11 = vector.load %arg3[%c0_11, %c5, %c0_12] : memref<4x8x16xf32, #tpu.memory_space<vmem>>, vector<4x1x16xf32>
      %c0_13 = arith.constant 0 : index
      %c2 = arith.constant 2 : index
      %c0_14 = arith.constant 0 : index
      %12 = vector.load %arg4[%c0_13, %c2, %c0_14] : memref<4x8x16xf32, #tpu.memory_space<vmem>>, vector<4x1x16xf32>
      tpu.vector_store %arg4[%c0_13, %c2, %c0_14], %11 {strides = array<i32>} : memref<4x8x16xf32, #tpu.memory_space<vmem>>, vector<4x1x16xf32>,
      %c0_15 = arith.constant 0 : index
      %c4 = arith.constant 4 : index
      %c0_16 = arith.constant 0 : index
      %13 = vector.load %arg3[%c0_15, %c4, %c0_16] : memref<4x8x16xf32, #tpu.memory_space<vmem>>, vector<4x1x16xf32>
      %c0_17 = arith.constant 0 : index
      %c3 = arith.constant 3 : index
      %c0_18 = arith.constant 0 : index
      %14 = vector.load %arg4[%c0_17, %c3, %c0_18] : memref<4x8x16xf32, #tpu.memory_space<vmem>>, vector<4x1x16xf32>
      tpu.vector_store %arg4[%c0_17, %c3, %c0_18], %13 {strides = array<i32>} : memref<4x8x16xf32, #tpu.memory_space<vmem>>, vector<4x1x16xf32>,
      %c0_19 = arith.constant 0 : index
      %c3_20 = arith.constant 3 : index
      %c0_21 = arith.constant 0 : index
      %15 = vector.load %arg3[%c0_19, %c3_20, %c0_21] : memref<4x8x16xf32, #tpu.memory_space<vmem>>, vector<4x1x16xf32>
      %c0_22 = arith.constant 0 : index
      %c4_23 = arith.constant 4 : index
      %c0_24 = arith.constant 0 : index
      %16 = vector.load %arg4[%c0_22, %c4_23, %c0_24] : memref<4x8x16xf32, #tpu.memory_space<vmem>>, vector<4x1x16xf32>
      tpu.vector_store %arg4[%c0_22, %c4_23, %c0_24], %15 {strides = array<i32>} : memref<4x8x16xf32, #tpu.memory_space<vmem>>, vector<4x1x16xf32>,
      %c0_25 = arith.constant 0 : index
      %c2_26 = arith.constant 2 : index
      %c0_27 = arith.constant 0 : index
      %17 = vector.load %arg3[%c0_25, %c2_26, %c0_27] : memref<4x8x16xf32, #tpu.memory_space<vmem>>, vector<4x1x16xf32>
      %c0_28 = arith.constant 0 : index
      %c5_29 = arith.constant 5 : index
      %c0_30 = arith.constant 0 : index
      %18 = vector.load %arg4[%c0_28, %c5_29, %c0_30] : memref<4x8x16xf32, #tpu.memory_space<vmem>>, vector<4x1x16xf32>
      tpu.vector_store %arg4[%c0_28, %c5_29, %c0_30], %17 {strides = array<i32>} : memref<4x8x16xf32, #tpu.memory_space<vmem>>, vector<4x1x16xf32>,
      %c0_31 = arith.constant 0 : index
      %c1_32 = arith.constant 1 : index
      %c0_33 = arith.constant 0 : index
      %19 = vector.load %arg3[%c0_31, %c1_32, %c0_33] : memref<4x8x16xf32, #tpu.memory_space<vmem>>, vector<4x1x16xf32>
      %c0_34 = arith.constant 0 : index
      %c6_35 = arith.constant 6 : index
      %c0_36 = arith.constant 0 : index
      %20 = vector.load %arg4[%c0_34, %c6_35, %c0_36] : memref<4x8x16xf32, #tpu.memory_space<vmem>>, vector<4x1x16xf32>
      tpu.vector_store %arg4[%c0_34, %c6_35, %c0_36], %19 {strides = array<i32>} : memref<4x8x16xf32, #tpu.memory_space<vmem>>, vector<4x1x16xf32>,
      %c0_37 = arith.constant 0 : index
      %c0_38 = arith.constant 0 : index
      %c0_39 = arith.constant 0 : index
      %21 = vector.load %arg3[%c0_37, %c0_38, %c0_39] : memref<4x8x16xf32, #tpu.memory_space<vmem>>, vector<4x1x16xf32>
      %c0_40 = arith.constant 0 : index
      %c7_41 = arith.constant 7 : index
      %c0_42 = arith.constant 0 : index
      %22 = vector.load %arg4[%c0_40, %c7_41, %c0_42] : memref<4x8x16xf32, #tpu.memory_space<vmem>>, vector<4x1x16xf32>
      tpu.vector_store %arg4[%c0_40, %c7_41, %c0_42], %21 {strides = array<i32>} : memref<4x8x16xf32, #tpu.memory_space<vmem>>, vector<4x1x16xf32>,
    } else {
    }
    %true = arith.constant true
    %4 = arith.xori %1, %true : i1
    %5 = arith.extui %4 : i1 to i32
    %c0_i32_1 = arith.constant 0 : i32
    %6 = arith.cmpi ne, %5, %c0_i32_1 : i32
    scf.if %6 {
      %c0_2 = arith.constant 0 : index
      %c0_3 = arith.constant 0 : index
      %c0_4 = arith.constant 0 : index
      %7 = vector.load %arg3[%c0_2, %c0_3, %c0_4] : memref<4x8x16xf32, #tpu.memory_space<vmem>>, vector<4x8x16xf32>
      %c0_5 = arith.constant 0 : index
      %c0_6 = arith.constant 0 : index
      %c0_7 = arith.constant 0 : index
      %8 = vector.load %arg4[%c0_5, %c0_6, %c0_7] : memref<4x8x16xf32, #tpu.memory_space<vmem>>, vector<4x8x16xf32>
      tpu.vector_store %arg4[%c0_5, %c0_6, %c0_7], %7 {strides = array<i32>} : memref<4x8x16xf32, #tpu.memory_space<vmem>>, vector<4x8x16xf32>,
    } else {
    }
    return
  }
  func.func @transform_0(%arg0: i32, %arg1: i32, %arg2: memref<1xi32, #tpu.memory_space<smem>>) -> (i32, i32, i32) {
    %c0 = arith.constant 0 : index
    %0 = memref.load %arg2[%c0] : memref<1xi32, #tpu.memory_space<smem>>
    %c0_i32 = arith.constant 0 : i32
    %1 = arith.cmpi ne, %0, %c0_i32 : i32
    %c1_i32 = arith.constant 1 : i32
    %2 = arith.subi %c1_i32, %arg1 : i32
    %3 = arith.select %1, %2, %arg1 : i32
    %c0_i32_0 = arith.constant 0 : i32
    %c0_i32_1 = arith.constant 0 : i32
    return %arg0, %3, %c0_i32_0 : i32, i32, i32
  }
  func.func @transform_1(%arg0: i32, %arg1: i32, %arg2: memref<1xi32, #tpu.memory_space<smem>>) -> (i32, i32, i32) {
    %c0_i32 = arith.constant 0 : i32
    %c0_i32_0 = arith.constant 0 : i32
    return %arg0, %arg1, %c0_i32 : i32, i32, i32
  }
}

</mosaic_0001>

<llo_original>
// kernel: tpu_custom_call.1
$region0: #{tpu_custom_call.1}
  #allocation0 [shape = 'u32[]', space=smem, size = 0x4, offset = 0x4, fixed_abs, tag = 'smem constant byte address 0x4 - core index']
  #allocation1 [shape = 'u32[144,128]{1,0:T(1,128)}', space=vmem, size = 0x12000, scoped, tag = 'internal scratch']
  #allocation2 [shape = 's32[1]{0}', space=sflag, size = 0x4, scoped, tag = 'scoped memory for tpu_custom_call.1']
  #allocation3 [shape = 's32[1]{0:T(128)S(6)}', space=smem, size = 0x200, scoped, tag = 'prefetched SMEM operand 0']
  %s0 = inlined_call_operand.<no memory space> [shape: s32[1], index: 0, kind: input, shape index: {}]
  %s1 = inlined_call_operand.hbm [shape: f32[4,16,16], index: 1, kind: input, shape index: {}]
  %s2 = inlined_call_operand.hbm [shape: f32[4,16,16], index: 2, kind: output, shape index: {}]
  %s3 = sld [smem:[#allocation0]]
  $region49: #{tpu_custom_call.1} parent=0
    _
  %s5 = ssub.s32 1, %s3
  %s6 = scalar_select 0, %s5, %s3
  %7 = sst [smem:[#allocation3]] %s0
  $region1: #{tpu_custom_call.1} parent=0
    #allocation4 [shape = 'u8[32768]{0}', space=vmem, size = 0x8000, scoped, tag = 'input window, operand 1']
    #allocation5 [shape = 's32[2]{0}', space=sflag, size = 0x8, scoped, tag = 'scoped memory for tpu_custom_call.1']
    #allocation6 [shape = 's32[2]{0}', space=sflag, size = 0x8, scoped, tag = 'scoped memory for tpu_custom_call.1']
    #allocation7 [shape = 'u8[32768]{0}', space=vmem, size = 0x8000, scoped, tag = 'output window, operand 0']
    %8 = vsyncpa [#allocation5], 0
    %s9 = scalar_lea.sflag [#allocation5], 1
    %10 = vsyncpa %s9, 0
    %11 = vsyncpa [#allocation6], 0
    %s12 = scalar_lea.sflag [#allocation6], 1
    %13 = vsyncpa %s12, 0
    loop: start=0, step=1, limit=4
    $region2: #{tpu_custom_call.1} parent=1 // loop_pre_header
      _
    $region3: #{tpu_custom_call.1} parent=1 // loop_header
      %s15 = sphi 0, %s19
      %p16 = scmp.ge.s32.totalorder %s15, 4
      %s22 = sphi 0, %s34
      %s23 = sphi 0, %s30
      %s24 = sphi 0, %s22
      %s25 = sphi 0, %s23
      %s26 = sphi 0, %s24
      %s27 = sphi 0, %s25
      %s47 = sphi 0, %s49
      %s50 = sphi 0, %s47
      %s51 = sphi 0, %s50
      %s67 = sphi 0, %s51
      %s75 = sphi 0, %s77
      %s78 = sphi 0, %s75
      %s79 = sphi 0, %s78
      %s95 = sphi 0, %s79
    $region4: #{tpu_custom_call.1} parent=1 // loop_header_branch
      %18 = sbr.rel (%p16) target = $region8
    $region5: #{tpu_custom_call.1} parent=1 // loop_body
      %s20 = ssub.s32 %s15, 1
      %s21 = ssub.s32 %s15, 2
      %s28 = sadd.s32 1, %s23
      %p29 = scmp.ge.s32.totalorder %s28, 2
      %s30 = scalar_select %p29, 0, %s28
      %s31 = sadd.s32 1, %s22
      %s32 = scalar_select %p29, %s31, %s22
      %p33 = scmp.ge.s32.totalorder %s32, 1
      %s34 = scalar_select %p33, 0, %s32
      %s35 = sld [smem:[#allocation3]]
      %p36 = scmp.ne.s32.totalorder %s35, 0
      %s37 = ssub.s32 1, %s23
      %s38 = scalar_select %p36, %s37, %s23
      %s39 = sld [smem:[#allocation3]]
      %p40 = scmp.ne.s32.totalorder %s39, 0
      %s41 = ssub.s32 1, %s30
      %s42 = scalar_select %p40, %s41, %s30
      %s43 = ssub.s32 %s22, %s34
      %s44 = ssub.s32 %s38, %s42
      %s45 = sor.u32 %s43, %s44
      %p46 = scmp.eq.s32.totalorder %s45, 0
      %s48 = sadd.s32 %s47, 1
      %s49 = scalar_select %p46, %s47, %s48
      %p52 = pneg %p46
      %p53 = scmp.eq.s32.totalorder %s15, 1
      %p54 = por %p52, %p53
      %p55 = scmp.ne.s32.totalorder %s47, %s50
      %p56 = scmp.eq.s32.totalorder %s15, 0
      %p57 = por %p55, %p56
      %p58 = scmp.ne.s32.totalorder %s47, %s50
      %p59 = scmp.eq.s32.totalorder %s20, 1
      %p60 = por %p58, %p59
      %p61 = scmp.ne.s32.totalorder %s50, %s51
      %p62 = scmp.eq.s32.totalorder %s20, 0
      %p63 = por %p61, %p62
      %p64 = scmp.ne.s32.totalorder %s50, %s51
      %p65 = scmp.eq.s32.totalorder %s21, 1
      %p66 = por %p64, %p65
      %p68 = scmp.ne.s32.totalorder %s51, %s67
      %p69 = scmp.eq.s32.totalorder %s21, 0
      %p70 = por %p68, %p69
      %s71 = ssub.s32 %s22, %s34
      %s72 = ssub.s32 %s23, %s30
      %s73 = sor.u32 %s71, %s72
      %p74 = scmp.eq.s32.totalorder %s73, 0
      %s76 = sadd.s32 %s75, 1
      %s77 = scalar_select %p74, %s75, %s76
      %p80 = pneg %p74
      %p81 = scmp.eq.s32.totalorder %s15, 1
      %p82 = por %p80, %p81
      %p83 = scmp.ne.s32.totalorder %s75, %s78
      %p84 = scmp.eq.s32.totalorder %s15, 0
      %p85 = por %p83, %p84
      %p86 = scmp.ne.s32.totalorder %s75, %s78
      %p87 = scmp.eq.s32.totalorder %s20, 1
      %p88 = por %p86, %p87
      %p89 = scmp.ne.s32.totalorder %s78, %s79
      %p90 = scmp.eq.s32.totalorder %s20, 0
      %p91 = por %p89, %p90
      %p92 = scmp.ne.s32.totalorder %s78, %s79
      %p93 = scmp.eq.s32.totalorder %s21, 1
      %p94 = por %p92, %p93
      %p96 = scmp.ne.s32.totalorder %s79, %s95
      %p97 = scmp.eq.s32.totalorder %s21, 0
      %p98 = por %p96, %p97
      %p99 = scmp.le.s32.totalorder 1, %s15
      %p100 = scmp.lt.s32.totalorder %s15, 3
      %p101 = pnand %p99, %p100
      %p102 = pneg %p101
      // Predicated region
      $region9: #{tpu_custom_call.1} parent=5 // pred_check
        _
      $region10: #{tpu_custom_call.1} parent=5 // pred_check_branch
        %104 = sbr.rel (%p101) target = $region12
      $region11: #{tpu_custom_call.1} parent=5 // pred_region
        %s105 = ssub.s32 %s15, 1
      $region12: #{tpu_custom_call.1} parent=5 // pred_fallthru
        _
      %p106 = scmp.lt.s32.totalorder %s15, 2
      // Predicated region
      $region13: #{tpu_custom_call.1} parent=5 // pred_check
        %p107 = pneg %p106
      $region14: #{tpu_custom_call.1} parent=5 // pred_check_branch
        %109 = sbr.rel (%p107) target = $region16
      $region15: #{tpu_custom_call.1} parent=5 // pred_region
        // Predicated region
        $region17: #{tpu_custom_call.1} parent=15 // pred_check
          %p110 = pneg %p57
        $region18: #{tpu_custom_call.1} parent=15 // pred_check_branch
          %112 = sbr.rel (%p110) target = $region20
        $region19: #{tpu_custom_call.1} parent=15 // pred_region
          %s113 = sand.u32 %s47, 1
          %s114 = scalar_lea.sflag [#allocation5], %s113
          %s115 = sand.u32 %s47, 1
          %s116 = smul.addr %s115, 32
          %s117 = scalar_lea.vmem [#allocation4], %s116
          %s118 = sld [smem:[#allocation3]]
          %p119 = scmp.ne.s32.totalorder %s118, 0
          %s120 = ssub.s32 1, %s23
          %s121 = scalar_select %p119, %s120, %s23
          %s122 = smul.u32 4, %s22
          %s124 = ssub.s32 512, 512
          %125 = vsyncadd %s114, %s124
          %s126 = smul.addr %s122, 2
          %s127 = sadd.s32 %s121, %s126
          %s128 = smul.addr %s127, 128
          %s129 = scalar_lea.hbm %s1, %s128
          %s130 = sshll.u32 %s117, 4
          %s131 = int_to_ptr.vmem [resolvable:$true] %s130
          %136 = dma.hbm_to_vmem [thread:$0]  %s129, 512, %s131, %s114, 256, 128, 8
        $region20: #{tpu_custom_call.1} parent=15 // pred_fallthru
          _
      $region16: #{tpu_custom_call.1} parent=5 // pred_fallthru
        _
      %p137 = scmp.le.s32.totalorder 1, %s15
      %p138 = scmp.lt.s32.totalorder %s15, 3
      %p139 = pnand %p137, %p138
      %p140 = pneg %p139
      // Predicated region
      $region21: #{tpu_custom_call.1} parent=5 // pred_check
        _
      $region22: #{tpu_custom_call.1} parent=5 // pred_check_branch
        %142 = sbr.rel (%p139) target = $region24
      $region23: #{tpu_custom_call.1} parent=5 // pred_region
        %s143 = ssub.s32 %s15, 1
        %s144 = sand.u32 %s50, 1
        %s145 = scalar_lea.sflag [#allocation5], %s144
        %s146 = sand.u32 %s50, 1
        %s147 = smul.addr %s146, 32
        %s148 = scalar_lea.vmem [#allocation4], %s147
        // Predicated region
        $region25: #{tpu_custom_call.1} parent=23 // pred_check
          %p149 = pneg %p63
        $region26: #{tpu_custom_call.1} parent=23 // pred_check_branch
          %151 = sbr.rel (%p149) target = $region28
        $region27: #{tpu_custom_call.1} parent=23 // pred_region
          %152 = dma.done %s145, 512
        $region28: #{tpu_custom_call.1} parent=23 // pred_fallthru
          _
        %s153 = sand.u32 %s50, 1
        %s154 = scalar_lea.sflag [#allocation5], %s153
        %s155 = sand.u32 %s50, 1
        %s156 = smul.addr %s155, 32
        %s157 = scalar_lea.vmem [#allocation4], %s156
        %p158 = pneg %p63
        %p159 = pneg %p60
        %p160 = pneg %p91
        %p161 = pneg %p88
        %s162 = sand.u32 %s78, 1
        %s163 = scalar_lea.sflag [#allocation6], %s162
        %s164 = sand.u32 %s78, 1
        %s165 = smul.addr %s164, 32
        %s166 = scalar_lea.vmem [#allocation7], %s165
        %s167 = sld [smem:[#allocation3]]
        %p168 = scmp.ne.s32.totalorder %s167, 0
        %s169 = ssub.s32 1, %s25
        %s170 = scalar_select %p168, %s169, %s25
        %s171 = smul.u32 4, %s24
        %s172 = smul.u32 4, %s24
        %s173 = sld [smem:[#allocation3]]
        %p174 = scmp.ne.s32.totalorder %s173, 0
        // Predicated region
        $region29: #{tpu_custom_call.1} parent=23 // pred_check
          %p175 = pneg %p174
        $region30: #{tpu_custom_call.1} parent=23 // pred_check_branch
          %177 = sbr.rel (%p175) target = $region32
        $region31: #{tpu_custom_call.1} parent=23 // pred_region
          %v178 = vld [vmem:[%s148 + $0x7] sm:$0x1]
          %v179 = vld [vmem:[%s148 + $0xf] sm:$0x1]
          %v180 = vld [vmem:[%s148 + $0x17] sm:$0x1]
          %v181 = vld [vmem:[%s148 + $0x1f] sm:$0x1]
          %vm182 = vcmask 122880
          %183 = vst.msk [vmem:[%s166] sm:$0x1] %vm182, %v178
          %184 = vst.msk [vmem:[%s166 + $0x8] sm:$0x1] %vm182, %v179
          %185 = vst.msk [vmem:[%s166 + $0x10] sm:$0x1] %vm182, %v180
          %186 = vst.msk [vmem:[%s166 + $0x18] sm:$0x1] %vm182, %v181
          %v187 = vld [vmem:[%s148 + $0x6] sm:$0x1]
          %v188 = vld [vmem:[%s148 + $0xe] sm:$0x1]
          %v189 = vld [vmem:[%s148 + $0x16] sm:$0x1]
          %v190 = vld [vmem:[%s148 + $0x1e] sm:$0x1]
          %191 = vst.msk [vmem:[%s166 + $0x1] sm:$0x1] %vm182, %v187
          %192 = vst.msk [vmem:[%s166 + $0x9] sm:$0x1] %vm182, %v188
          %193 = vst.msk [vmem:[%s166 + $0x11] sm:$0x1] %vm182, %v189
          %194 = vst.msk [vmem:[%s166 + $0x19] sm:$0x1] %vm182, %v190
          %v195 = vld [vmem:[%s148 + $0x5] sm:$0x1]
          %v196 = vld [vmem:[%s148 + $0xd] sm:$0x1]
          %v197 = vld [vmem:[%s148 + $0x15] sm:$0x1]
          %v198 = vld [vmem:[%s148 + $0x1d] sm:$0x1]
          %199 = vst.msk [vmem:[%s166 + $0x2] sm:$0x1] %vm182, %v195
          %200 = vst.msk [vmem:[%s166 + $0xa] sm:$0x1] %vm182, %v196
          %201 = vst.msk [vmem:[%s166 + $0x12] sm:$0x1] %vm182, %v197
          %202 = vst.msk [vmem:[%s166 + $0x1a] sm:$0x1] %vm182, %v198
          %v203 = vld [vmem:[%s148 + $0x4] sm:$0x1]
          %v204 = vld [vmem:[%s148 + $0xc] sm:$0x1]
          %v205 = vld [vmem:[%s148 + $0x14] sm:$0x1]
          %v206 = vld [vmem:[%s148 + $0x1c] sm:$0x1]
          %207 = vst.msk [vmem:[%s166 + $0x3] sm:$0x1] %vm182, %v203
          %208 = vst.msk [vmem:[%s166 + $0xb] sm:$0x1] %vm182, %v204
          %209 = vst.msk [vmem:[%s166 + $0x13] sm:$0x1] %vm182, %v205
          %210 = vst.msk [vmem:[%s166 + $0x1b] sm:$0x1] %vm182, %v206
          %v211 = vld [vmem:[%s148 + $0x3] sm:$0x1]
          %v212 = vld [vmem:[%s148 + $0xb] sm:$0x1]
          %v213 = vld [vmem:[%s148 + $0x13] sm:$0x1]
          %v214 = vld [vmem:[%s148 + $0x1b] sm:$0x1]
          %215 = vst.msk [vmem:[%s166 + $0x4] sm:$0x1] %vm182, %v211
          %216 = vst.msk [vmem:[%s166 + $0xc] sm:$0x1] %vm182, %v212
          %217 = vst.msk [vmem:[%s166 + $0x14] sm:$0x1] %vm182, %v213
          %218 = vst.msk [vmem:[%s166 + $0x1c] sm:$0x1] %vm182, %v214
          %v219 = vld [vmem:[%s148 + $0x2] sm:$0x1]
          %v220 = vld [vmem:[%s148 + $0xa] sm:$0x1]
          %v221 = vld [vmem:[%s148 + $0x12] sm:$0x1]
          %v222 = vld [vmem:[%s148 + $0x1a] sm:$0x1]
          %223 = vst.msk [vmem:[%s166 + $0x5] sm:$0x1] %vm182, %v219
          %224 = vst.msk [vmem:[%s166 + $0xd] sm:$0x1] %vm182, %v220
          %225 = vst.msk [vmem:[%s166 + $0x15] sm:$0x1] %vm182, %v221
          %226 = vst.msk [vmem:[%s166 + $0x1d] sm:$0x1] %vm182, %v222
          %v227 = vld [vmem:[%s148 + $0x1] sm:$0x1]
          %v228 = vld [vmem:[%s148 + $0x9] sm:$0x1]
          %v229 = vld [vmem:[%s148 + $0x11] sm:$0x1]
          %v230 = vld [vmem:[%s148 + $0x19] sm:$0x1]
          %231 = vst.msk [vmem:[%s166 + $0x6] sm:$0x1] %vm182, %v227
          %232 = vst.msk [vmem:[%s166 + $0xe] sm:$0x1] %vm182, %v228
          %233 = vst.msk [vmem:[%s166 + $0x16] sm:$0x1] %vm182, %v229
          %234 = vst.msk [vmem:[%s166 + $0x1e] sm:$0x1] %vm182, %v230
          %v235 = vld [vmem:[%s148] sm:$0x1]
          %v236 = vld [vmem:[%s148 + $0x8] sm:$0x1]
          %v237 = vld [vmem:[%s148 + $0x10] sm:$0x1]
          %v238 = vld [vmem:[%s148 + $0x18] sm:$0x1]
          %239 = vst.msk [vmem:[%s166 + $0x7] sm:$0x1] %vm182, %v235
          %240 = vst.msk [vmem:[%s166 + $0xf] sm:$0x1] %vm182, %v236
          %241 = vst.msk [vmem:[%s166 + $0x17] sm:$0x1] %vm182, %v237
          %242 = vst.msk [vmem:[%s166 + $0x1f] sm:$0x1] %vm182, %v238
        $region32: #{tpu_custom_call.1} parent=23 // pred_fallthru
          _
        %p243 = scmp.eq.s32.totalorder %s173, 0
        // Predicated region
        $region33: #{tpu_custom_call.1} parent=23 // pred_check
          %p244 = pneg %p243
        $region34: #{tpu_custom_call.1} parent=23 // pred_check_branch
          %246 = sbr.rel (%p244) target = $region36
        $region35: #{tpu_custom_call.1} parent=23 // pred_region
          %v247 = vld [vmem:[%s148] sm:$0xff]
          %v248 = vld [vmem:[%s148 + $0x8] sm:$0xff]
          %v249 = vld [vmem:[%s148 + $0x10] sm:$0xff]
          %v250 = vld [vmem:[%s148 + $0x18] sm:$0xff]
          %vm251 = vcmask 130048
          %252 = vst.msk [vmem:[%s166] sm:$0xff] %vm251, %v247
          %253 = vst.msk [vmem:[%s166 + $0x8] sm:$0xff] %vm251, %v248
          %254 = vst.msk [vmem:[%s166 + $0x10] sm:$0xff] %vm251, %v249
          %255 = vst.msk [vmem:[%s166 + $0x18] sm:$0xff] %vm251, %v250
        $region36: #{tpu_custom_call.1} parent=23 // pred_fallthru
          _
        %s256 = sand.u32 %s78, 1
        %s257 = scalar_lea.sflag [#allocation6], %s256
        %s258 = sand.u32 %s78, 1
        %s259 = smul.addr %s258, 32
        %s260 = scalar_lea.vmem [#allocation7], %s259
        // Predicated region
        $region37: #{tpu_custom_call.1} parent=23 // pred_check
          %p261 = pneg %p88
        $region38: #{tpu_custom_call.1} parent=23 // pred_check_branch
          %263 = sbr.rel (%p261) target = $region40
        $region39: #{tpu_custom_call.1} parent=23 // pred_region
          %s264 = smul.u32 4, %s24
          %s266 = ssub.s32 512, 512
          %267 = vsyncadd %s257, %s266
          %s268 = smul.addr %s264, 2
          %s269 = sadd.s32 %s25, %s268
          %s270 = smul.addr %s269, 128
          %s271 = scalar_lea.hbm %s2, %s270
          %s272 = sshll.u32 %s260, 4
          %s273 = int_to_ptr.vmem [resolvable:$true] %s272
          %278 = dma.vmem_to_hbm [thread:$0]  %s273, 512, %s271, %s257, 128, 256, 8
        $region40: #{tpu_custom_call.1} parent=23 // pred_fallthru
          _
      $region24: #{tpu_custom_call.1} parent=5 // pred_fallthru
        _
      %p279 = scmp.le.s32.totalorder 2, %s15
      // Predicated region
      $region41: #{tpu_custom_call.1} parent=5 // pred_check
        %p280 = pneg %p279
      $region42: #{tpu_custom_call.1} parent=5 // pred_check_branch
        %282 = sbr.rel (%p280) target = $region44
      $region43: #{tpu_custom_call.1} parent=5 // pred_region
        %s283 = ssub.s32 %s15, 2
        // Predicated region
        $region45: #{tpu_custom_call.1} parent=43 // pred_check
          %p284 = pneg %p94
        $region46: #{tpu_custom_call.1} parent=43 // pred_check_branch
          %286 = sbr.rel (%p284) target = $region48
        $region47: #{tpu_custom_call.1} parent=43 // pred_region
          %s287 = sand.u32 %s79, 1
          %s288 = scalar_lea.sflag [#allocation6], %s287
          %s289 = sand.u32 %s79, 1
          %s290 = smul.addr %s289, 32
          %s291 = scalar_lea.vmem [#allocation7], %s290
          %292 = dma.done %s288, 512
        $region48: #{tpu_custom_call.1} parent=43 // pred_fallthru
          _
      $region44: #{tpu_custom_call.1} parent=5 // pred_fallthru
        _
    $region6: #{tpu_custom_call.1} parent=1 // loop_footer
      %s19 = sadd.s32 1, %s15
    $region7: #{tpu_custom_call.1} parent=1 // loop_footer_branch
      %14 = sbr.rel target = $region3
    $region8: #{tpu_custom_call.1} parent=1 // loop_exit
      _
    %293 = vsyncpa [#allocation5], 1
    %s294 = scalar_lea.sflag [#allocation5], 1
    %295 = vsyncpa %s294, 1
    %296 = vsyncpa [#allocation6], 1
    %s297 = scalar_lea.sflag [#allocation6], 1
    %298 = vsyncpa %s297, 1

</llo_original>
